<compile_context>
chip_gen: v7x
topology: tpu7x:2x2x1
jax: 0.10.0
libtpu: 0.0.40
codegen_flags: <defaults>
</compile_context>

<pallas_src>
import numpy as np
import jax
import jax.numpy as jnp
from jax.experimental import pallas as pl
from jax.experimental.pallas import tpu as pltpu


def _build_kernel(n_layers, matmul_dtype):
    """Fused MLP kernel operating in transposed form (features x batch-on-lanes)."""

    def kernel(x_ref, *args):
        w_refs = args[:n_layers]              # resident, pre-transposed (out_l, in_l)
        b_refs = args[n_layers:2 * n_layers]  # resident, (out_l, 1)
        o_ref = args[2 * n_layers]            # (out_dim, TB) -- batch on the lane axis

        h = x_ref[...]                        # (TB, in_dim) as supplied by the caller
        for li in range(n_layers):            # unrolled at trace time
            w = w_refs[li][...]
            rhs = h.astype(matmul_dtype)      # no-op for the default f32 path
            if li == 0:
                # Contract the feature axis of both operands:
                #   (out0, in) x (TB, in) -> (out0, TB).  Puts batch on lanes.
                h = jax.lax.dot_general(
                    w, rhs,
                    dimension_numbers=(((1,), (1,)), ((), ())),
                    preferred_element_type=jnp.float32)
            else:
                #   (out_l, h_prev) x (h_prev, TB) -> (out_l, TB)
                h = jnp.dot(w, rhs, preferred_element_type=jnp.float32)
            h = h + b_refs[li][...]           # (out_l, 1) broadcast over the lane axis
            if li < n_layers - 1:
                h = jnp.maximum(h, 0.0)       # hidden: ReLU (VPU)
            else:
                h = 2.0 * jnp.tanh(h)         # head: Tanh (EUP), then * 2
        o_ref[...] = h

    return kernel


def _derive_batch_tile(B, in_dim, layer_dims, *, max_tile_rows=8192,
                       min_steps_if_large=4, vmem_budget_bytes=40 << 20,
                       x_itemsize=4):
    """Rows of the batch processed per grid step.

    * B <= 1024: single block (block == full array, so no (8,128) alignment
      constraints and no per-step overhead at all).
    * Larger B: TB is a multiple of 128 (batch sits on the lane axis of the
      output block), capped so the grid keeps >= min_steps_if_large steps
      (v7x: 2 TensorCores need a few steps each to shard the parallel axis and
      keep their pipelines full) and so the per-step VMEM footprint stays well
      inside v7x's 64 MiB.
    """
    if B <= 1024:
        return B

    TB = min(max_tile_rows, pl.cdiv(B, min_steps_if_large))
    TB = max(128, (TB // 128) * 128)

    out_dim = layer_dims[-1]
    widest = max(layer_dims)

    def per_step_bytes(tb):
        return (3 * tb * in_dim * x_itemsize   # streamed x, up to 3 buffers
                + 2 * out_dim * tb * 4         # streamed out, double-buffered
                + 2 * tb * widest * 4)         # live f32 activations

    while TB > 128 and per_step_bytes(TB) > vmem_budget_bytes:
        TB = max(128, ((TB // 2) // 128) * 128)
    return TB


def classifier_forward(x, weights, biases, *, max_tile_rows=8192,
                       matmul_dtype=jnp.float32, return_transposed=False):
    """Fused Classifier forward.  weights[i]: [in_i, out_i], biases[i]: [out_i]."""
    x = jnp.asarray(x)
    if not jnp.issubdtype(x.dtype, jnp.floating):
        x = x.astype(jnp.float32)             # torch.as_tensor(..., float32) analogue
    B, in_dim = x.shape
    n_layers = len(weights)
    layer_dims = tuple(int(w.shape[1]) for w in weights)
    out_dim = layer_dims[-1]

    # One-time operand prep (tiny XLA ops, outside the kernel):
    #   * weights transposed to (out, in) and pre-cast (they stay VMEM-resident)
    #   * biases as (out, 1) f32 columns (broadcast over the lane/batch axis)
    wTs = [jnp.asarray(w).T.astype(matmul_dtype) for w in weights]
    bcols = [jnp.reshape(jnp.asarray(b), (-1, 1)).astype(jnp.float32) for b in biases]

    TB = _derive_batch_tile(B, in_dim, layer_dims, max_tile_rows=max_tile_rows,
                            x_itemsize=x.dtype.itemsize)
    steps = pl.cdiv(B, TB)

    # x is streamed over the batch grid; everything else is resident (constant map).
    if steps >= 3:
        # Per-step compute is tiny (three small-K matmuls + ReLU/tanh): give the
        # streamed input a third buffer so the next-tile DMA stays hidden.
        x_spec = pl.BlockSpec((TB, in_dim), lambda i: (i, 0),
                              pipeline_mode=pl.Buffered(3))
    else:
        x_spec = pl.BlockSpec((TB, in_dim), lambda i: (i, 0))
    in_specs = [x_spec]
    in_specs += [pl.BlockSpec(w.shape, lambda i: (0, 0)) for w in wTs]
    in_specs += [pl.BlockSpec(b.shape, lambda i: (0, 0)) for b in bcols]

    # Explicit VMEM budget: resident weights/biases + streamed x (<=3 buffers)
    # + streamed out (2 buffers) + widest live f32 intermediates, with 2x margin.
    resident = (sum(int(w.size) * w.dtype.itemsize for w in wTs)
                + sum(int(b.size) * 4 for b in bcols))
    per_step = (3 * TB * in_dim * x.dtype.itemsize
                + 2 * out_dim * TB * 4
                + 2 * TB * max(layer_dims) * 4)
    vmem_limit = int(min(64 << 20, max(16 << 20, 2 * (resident + per_step))))

    out_t = pl.pallas_call(
        _build_kernel(n_layers, matmul_dtype),
        out_shape=jax.ShapeDtypeStruct((out_dim, B), jnp.float32),
        grid=(steps,),
        in_specs=in_specs,
        out_specs=pl.BlockSpec((out_dim, TB), lambda i: (0, i)),   # lane-dense output
        compiler_params=pltpu.CompilerParams(
            dimension_semantics=("parallel",),       # megacore-shard batch on v7x
            vmem_limit_bytes=vmem_limit),
    )(x, *wTs, *bcols)

    if return_transposed:
        return out_t              # (out_dim, B): lane-dense, for fused consumers
    return out_t.T                # (B, out_dim): matches the PyTorch module


def _linear_init(key, fan_in, fan_out):
    # Deterministic analogue of torch.nn.Linear default init: U(-1/sqrt(fan_in), +).
    kw, kb = jax.random.split(key)
    bound = 1.0 / np.sqrt(fan_in)
    w = jax.random.uniform(kw, (fan_in, fan_out), jnp.float32, -bound, bound)
    b = jax.random.uniform(kb, (fan_out,), jnp.float32, -bound, bound)
    return w, b


def _reference(x, weights, biases):
    h = x
    for i, (w, b) in enumerate(zip(weights, biases)):
        h = h @ w + b.reshape(1, -1)
        h = jnp.maximum(h, 0.0) if i < len(weights) - 1 else jnp.tanh(h)
    return 2.0 * h


if __name__ == "__main__":
    # Classifier(input_dim=16, output_dim=2, fc_layer_params=(32, 32)) on batch 8.
    B, input_dim, hidden, output_dim = 8, 16, (32, 32), 2

    key = jax.random.PRNGKey(0)
    kx, k1, k2, k3 = jax.random.split(key, 4)

    w1, b1 = _linear_init(k1, input_dim, hidden[0])
    w2, b2 = _linear_init(k2, hidden[0], hidden[1])
    w3, b3 = _linear_init(k3, hidden[1], output_dim)
    weights = [w1, w2, w3]
    biases = [b1, b2, b3]

    x = jax.random.normal(kx, (B, input_dim), jnp.float32)

    out = classifier_forward(x, weights, biases)
    out = jax.block_until_ready(out)

    ref = _reference(x, weights, biases)
    assert out.shape == (B, output_dim)
    assert bool(jnp.all(jnp.isfinite(out)))
    np.testing.assert_allclose(np.asarray(out), np.asarray(ref),
                               rtol=1e-3, atol=1e-3)

    print("KERNEL_OK")
</pallas_src>

<mosaic_0001>
module attributes {stable_mosaic.version = 11 : i64} {
  func.func @kernel(%arg0: i32, %arg1: memref<8x16xf32, #tpu.memory_space<vmem>>, %arg2: memref<32x16xf32, #tpu.memory_space<vmem>>, %arg3: memref<32x32xf32, #tpu.memory_space<vmem>>, %arg4: memref<2x32xf32, #tpu.memory_space<vmem>>, %arg5: memref<32x1xf32, #tpu.memory_space<vmem>>, %arg6: memref<32x1xf32, #tpu.memory_space<vmem>>, %arg7: memref<2x1xf32, #tpu.memory_space<vmem>>, %arg8: memref<2x8xf32, #tpu.memory_space<vmem>>) attributes {dimension_semantics = [#tpu.dimension_semantics<parallel>], iteration_bounds = array<i64: 1>, scalar_prefetch = 0 : i64, scratch_operands = 0 : i64, tpu.core_type = #tpu.core_type<tc>, window_params = [{transform_indices = @transform_0, window_bounds = array<i64: 8, 16>}, {pipeline_mode = #tpu.pipeline_mode<synchronous>, transform_indices = @transform_1, window_bounds = array<i64: 32, 16>}, {pipeline_mode = #tpu.pipeline_mode<synchronous>, transform_indices = @transform_2, window_bounds = array<i64: 32, 32>}, {pipeline_mode = #tpu.pipeline_mode<synchronous>, transform_indices = @transform_3, window_bounds = array<i64: 2, 32>}, {pipeline_mode = #tpu.pipeline_mode<synchronous>, transform_indices = @transform_4, window_bounds = array<i64: 32, 1>}, {pipeline_mode = #tpu.pipeline_mode<synchronous>, transform_indices = @transform_5, window_bounds = array<i64: 32, 1>}, {pipeline_mode = #tpu.pipeline_mode<synchronous>, transform_indices = @transform_6, window_bounds = array<i64: 2, 1>}, {transform_indices = @transform_7, window_bounds = array<i64: 2, 8>}]} {
    %c0 = arith.constant 0 : index
    %c0_0 = arith.constant 0 : index
    %0 = vector.load %arg1[%c0, %c0_0] : memref<8x16xf32, #tpu.memory_space<vmem>>, vector<8x16xf32>
    %c0_1 = arith.constant 0 : index
    %c0_2 = arith.constant 0 : index
    %1 = vector.load %arg2[%c0_1, %c0_2] : memref<32x16xf32, #tpu.memory_space<vmem>>, vector<32x16xf32>
    %cst = arith.constant dense<0.000000e+00> : vector<32x8xf32>
    %2 = tpu.matmul %1, %0, %cst {dimension_numbers = #tpu.dot_dimension_numbers<[1], [1], [0], [0], [0, 0, 1, 0], [], []>} : vector<32x16xf32>, vector<8x16xf32>, vector<32x8xf32> -> vector<32x8xf32>
    %c0_3 = arith.constant 0 : index
    %c0_4 = arith.constant 0 : index
    %3 = vector.load %arg5[%c0_3, %c0_4] : memref<32x1xf32, #tpu.memory_space<vmem>>, vector<32x1xf32>
    %4 = vector.broadcast %3 : vector<32x1xf32> to vector<32x8xf32>
    %5 = arith.addf %2, %4 : vector<32x8xf32>
    %cst_5 = arith.constant 0.000000e+00 : f32
    %6 = vector.broadcast %cst_5 : f32 to vector<32x8xf32>
    %7 = arith.maximumf %5, %6 : vector<32x8xf32>
    %c0_6 = arith.constant 0 : index
    %c0_7 = arith.constant 0 : index
    %8 = vector.load %arg3[%c0_6, %c0_7] : memref<32x32xf32, #tpu.memory_space<vmem>>, vector<32x32xf32>
    %cst_8 = arith.constant dense<0.000000e+00> : vector<32x8xf32>
    %9 = tpu.matmul %8, %7, %cst_8 {dimension_numbers = #tpu.dot_dimension_numbers<[1], [0], [0], [1], [0, 0, 1, 1], [], []>} : vector<32x32xf32>, vector<32x8xf32>, vector<32x8xf32> -> vector<32x8xf32>
    %c0_9 = arith.constant 0 : index
    %c0_10 = arith.constant 0 : index
    %10 = vector.load %arg6[%c0_9, %c0_10] : memref<32x1xf32, #tpu.memory_space<vmem>>, vector<32x1xf32>
    %11 = vector.broadcast %10 : vector<32x1xf32> to vector<32x8xf32>
    %12 = arith.addf %9, %11 : vector<32x8xf32>
    %cst_11 = arith.constant 0.000000e+00 : f32
    %13 = vector.broadcast %cst_11 : f32 to vector<32x8xf32>
    %14 = arith.maximumf %12, %13 : vector<32x8xf32>
    %c0_12 = arith.constant 0 : index
    %c0_13 = arith.constant 0 : index
    %15 = vector.load %arg4[%c0_12, %c0_13] : memref<2x32xf32, #tpu.memory_space<vmem>>, vector<2x32xf32>
    %cst_14 = arith.constant dense<0.000000e+00> : vector<2x8xf32>
    %16 = tpu.matmul %15, %14, %cst_14 {dimension_numbers = #tpu.dot_dimension_numbers<[1], [0], [0], [1], [0, 0, 1, 1], [], []>} : vector<2x32xf32>, vector<32x8xf32>, vector<2x8xf32> -> vector<2x8xf32>
    %c0_15 = arith.constant 0 : index
    %c0_16 = arith.constant 0 : index
    %17 = vector.load %arg7[%c0_15, %c0_16] : memref<2x1xf32, #tpu.memory_space<vmem>>, vector<2x1xf32>
    %18 = vector.broadcast %17 : vector<2x1xf32> to vector<2x8xf32>
    %19 = arith.addf %16, %18 : vector<2x8xf32>
    %20 = math.tanh %19 : vector<2x8xf32>
    %cst_17 = arith.constant 2.000000e+00 : f32
    %21 = vector.broadcast %cst_17 : f32 to vector<2x8xf32>
    %22 = arith.mulf %21, %20 : vector<2x8xf32>
    %c0_18 = arith.constant 0 : index
    %c0_19 = arith.constant 0 : index
    %23 = vector.load %arg8[%c0_18, %c0_19] : memref<2x8xf32, #tpu.memory_space<vmem>>, vector<2x8xf32>
    tpu.vector_store %arg8[%c0_18, %c0_19], %22 {strides = array<i32>} : memref<2x8xf32, #tpu.memory_space<vmem>>, vector<2x8xf32>,
    return
  }
  func.func @transform_0(%arg0: i32) -> (i32, i32) {
    %c0_i32 = arith.constant 0 : i32
    %c0_i32_0 = arith.constant 0 : i32
    return %arg0, %c0_i32 : i32, i32
  }
  func.func @transform_1(%arg0: i32) -> (i32, i32) {
    %c0_i32 = arith.constant 0 : i32
    %c0_i32_0 = arith.constant 0 : i32
    %c0_i32_1 = arith.constant 0 : i32
    return %c0_i32, %c0_i32_0 : i32, i32
  }
  func.func @transform_2(%arg0: i32) -> (i32, i32) {
    %c0_i32 = arith.constant 0 : i32
    %c0_i32_0 = arith.constant 0 : i32
    %c0_i32_1 = arith.constant 0 : i32
    return %c0_i32, %c0_i32_0 : i32, i32
  }
  func.func @transform_3(%arg0: i32) -> (i32, i32) {
    %c0_i32 = arith.constant 0 : i32
    %c0_i32_0 = arith.constant 0 : i32
    %c0_i32_1 = arith.constant 0 : i32
    return %c0_i32, %c0_i32_0 : i32, i32
  }
  func.func @transform_4(%arg0: i32) -> (i32, i32) {
    %c0_i32 = arith.constant 0 : i32
    %c0_i32_0 = arith.constant 0 : i32
    %c0_i32_1 = arith.constant 0 : i32
    return %c0_i32, %c0_i32_0 : i32, i32
  }
  func.func @transform_5(%arg0: i32) -> (i32, i32) {
    %c0_i32 = arith.constant 0 : i32
    %c0_i32_0 = arith.constant 0 : i32
    %c0_i32_1 = arith.constant 0 : i32
    return %c0_i32, %c0_i32_0 : i32, i32
  }
  func.func @transform_6(%arg0: i32) -> (i32, i32) {
    %c0_i32 = arith.constant 0 : i32
    %c0_i32_0 = arith.constant 0 : i32
    %c0_i32_1 = arith.constant 0 : i32
    return %c0_i32, %c0_i32_0 : i32, i32
  }
  func.func @transform_7(%arg0: i32) -> (i32, i32) {
    %c0_i32 = arith.constant 0 : i32
    %c0_i32_0 = arith.constant 0 : i32
    return %c0_i32, %arg0 : i32, i32
  }
}

</mosaic_0001>

<llo_original>
// kernel: tpu_custom_call.1
$region0: #{tpu_custom_call.1}
  #allocation0 [shape = 'u32[]', space=smem, size = 0x4, offset = 0x4, fixed_abs, tag = 'smem constant byte address 0x4 - core index']
  #allocation1 [shape = 'u32[144,128]{1,0:T(1,128)}', space=vmem, size = 0x12000, scoped, tag = 'internal scratch']
  %s0 = inlined_call_operand.vmem [shape: f32[8,16], index: 0, kind: input, shape index: {}]
  %s1 = inlined_call_operand.vmem [shape: f32[32,16], index: 1, kind: input, shape index: {}]
  %s2 = inlined_call_operand.vmem [shape: f32[32,32], index: 2, kind: input, shape index: {}]
  %s3 = inlined_call_operand.vmem [shape: f32[2,32], index: 3, kind: input, shape index: {}]
  %s4 = inlined_call_operand.vmem [shape: f32[32,1], index: 4, kind: input, shape index: {}]
  %s5 = inlined_call_operand.vmem [shape: f32[32,1], index: 5, kind: input, shape index: {}]
  %s6 = inlined_call_operand.vmem [shape: f32[2,1], index: 6, kind: input, shape index: {}]
  %s7 = inlined_call_operand.hbm [shape: f32[2,8], index: 7, kind: output, shape index: {}]
  %s8 = sld [smem:[#allocation0]]
  $region38: #{tpu_custom_call.1} parent=0
    _
  %s10 = ssub.s32 1, %s8
  %s11 = scalar_select 0, %s10, %s8
  $region1: #{tpu_custom_call.1} parent=0
    #allocation2 [shape = 'u8[1024]{0}', space=vmem, size = 0x400, scoped, tag = 'output window, operand 0, single buffered']
    #allocation3 [shape = 's32[1]{0}', space=sflag, size = 0x4, scoped, tag = 'scoped memory for tpu_custom_call.1']
    %12 = vsyncpa [#allocation3], 0
    // Predicated region
    $region2: #{tpu_custom_call.1} parent=1 // pred_check
      _
    $region3: #{tpu_custom_call.1} parent=1 // pred_check_branch
      %14 = sbr.rel (0) target = $region5
    $region4: #{tpu_custom_call.1} parent=1 // pred_region
      _
    $region5: #{tpu_custom_call.1} parent=1 // pred_fallthru
      _
    // Predicated region
    $region6: #{tpu_custom_call.1} parent=1 // pred_check
      _
    $region7: #{tpu_custom_call.1} parent=1 // pred_check_branch
      %16 = sbr.rel (0) target = $region9
    $region8: #{tpu_custom_call.1} parent=1 // pred_region
      _
    $region9: #{tpu_custom_call.1} parent=1 // pred_fallthru
      _
    // Predicated region
    $region10: #{tpu_custom_call.1} parent=1 // pred_check
      _
    $region11: #{tpu_custom_call.1} parent=1 // pred_check_branch
      %18 = sbr.rel (0) target = $region13
    $region12: #{tpu_custom_call.1} parent=1 // pred_region
      _
    $region13: #{tpu_custom_call.1} parent=1 // pred_fallthru
      _
    // Predicated region
    $region14: #{tpu_custom_call.1} parent=1 // pred_check
      _
    $region15: #{tpu_custom_call.1} parent=1 // pred_check_branch
      %20 = sbr.rel (0) target = $region17
    $region16: #{tpu_custom_call.1} parent=1 // pred_region
      _
    $region17: #{tpu_custom_call.1} parent=1 // pred_fallthru
      _
    // Predicated region
    $region18: #{tpu_custom_call.1} parent=1 // pred_check
      _
    $region19: #{tpu_custom_call.1} parent=1 // pred_check_branch
      %22 = sbr.rel (0) target = $region21
    $region20: #{tpu_custom_call.1} parent=1 // pred_region
      _
    $region21: #{tpu_custom_call.1} parent=1 // pred_fallthru
      _
    // Predicated region
    $region22: #{tpu_custom_call.1} parent=1 // pred_check
      _
    $region23: #{tpu_custom_call.1} parent=1 // pred_check_branch
      %24 = sbr.rel (0) target = $region25
    $region24: #{tpu_custom_call.1} parent=1 // pred_region
      _
    $region25: #{tpu_custom_call.1} parent=1 // pred_fallthru
      _
    // Predicated region
    $region26: #{tpu_custom_call.1} parent=1 // pred_check
      _
    $region27: #{tpu_custom_call.1} parent=1 // pred_check_branch
      %26 = sbr.rel (0) target = $region29
    $region28: #{tpu_custom_call.1} parent=1 // pred_region
      _
    $region29: #{tpu_custom_call.1} parent=1 // pred_fallthru
      _
    %v27 = vld [vmem:[%s0] sm:$0xff]
    %v28 = vld [vmem:[%s1] sm:$0xff]
    %v29 = vld [vmem:[%s1 + $0x8] sm:$0xff]
    %v30 = vld [vmem:[%s1 + $0x10] sm:$0xff]
    %v31 = vld [vmem:[%s1 + $0x18] sm:$0xff]
    %v32 = vld [vmem:[%s4] sm:$0xff]
    %v33 = vld [vmem:[%s4 + $0x8] sm:$0xff]
    %v34 = vld [vmem:[%s4 + $0x10] sm:$0xff]
    %v35 = vld [vmem:[%s4 + $0x18] sm:$0xff]
    %37 = vset.pattern.permute.xlu0 0
    %38 = vperm.xlu0 %37, %v32
    %v39 = vpop.permute.xlu0 %38
    %42 = vset.pattern.permute.xlu0 0
    %43 = vperm.xlu0 %42, %v33
    %v44 = vpop.permute.xlu0 %43
    %47 = vset.pattern.permute.xlu0 0
    %48 = vperm.xlu0 %47, %v34
    %v49 = vpop.permute.xlu0 %48
    %52 = vset.pattern.permute.xlu0 0
    %53 = vperm.xlu0 %52, %v35
    %v54 = vpop.permute.xlu0 %53
    %vm56 = vcmask 130048
    %v58 = vsel %vm56, %v28, 0
    %v61 = vsel %vm56, %v29, 0
    %v64 = vsel %vm56, %v30, 0
    %v67 = vsel %vm56, %v31, 0
    %v70 = vsel %vm56, %v27, 0
    %72 = vmatprep.subr.mxu0 0.0
    %73 = vmatpush1.xpose.msra.mxu0 %v70
    %74 = vmatprep.subr.mxu0 0.0
    %75 = vmatpush1.xpose.msra.mxu0 0.0
    %76 = vmatprep.subr.mxu0 0.0
    %77 = vmatpush1.xpose.msra.mxu0 0.0
    %78 = vmatprep.subr.mxu0 0.0
    %79 = vmatpush1.xpose.msra.mxu0 0.0
    %80 = vmatprep.subr.mxu0 0.0
    %81 = vmatpush1.xpose.msra.mxu0 0.0
    %82 = vmatprep.subr.mxu0 0.0
    %83 = vmatpush1.xpose.msra.mxu0 0.0
    %84 = vmatprep.subr.mxu0 0.0
    %85 = vmatpush1.xpose.msra.mxu0 0.0
    %86 = vmatprep.subr.mxu0 0.0
    %87 = vmatpush1.xpose.msra.mxu0 0.0
    %88 = vmatprep.subr.mxu0 0.0
    %89 = vmatpush1.xpose.msra.mxu0 0.0
    %90 = vmatprep.subr.mxu0 0.0
    %91 = vmatpush1.xpose.msra.mxu0 0.0
    %92 = vmatprep.subr.mxu0 0.0
    %93 = vmatpush1.xpose.msra.mxu0 0.0
    %94 = vmatprep.subr.mxu0 0.0
    %95 = vmatpush1.xpose.msra.mxu0 0.0
    %96 = vmatprep.subr.mxu0 0.0
    %97 = vmatpush1.xpose.msra.mxu0 0.0
    %98 = vmatprep.subr.mxu0 0.0
    %99 = vmatpush1.xpose.msra.mxu0 0.0
    %100 = vmatprep.subr.mxu0 0.0
    %101 = vmatpush1.xpose.msra.mxu0 0.0
    %102 = vmatprep.subr.mxu0 0.0
    %103 = vmatpush1.xpose.msra.mxu0 0.0
    %104 = vmatprep.subr.mxu0 0.0
    %105 = vmatpush1.xpose.msra.mxu0 0.0
    %106 = vmatprep.subr.mxu0 0.0
    %107 = vmatpush1.xpose.msra.mxu0 0.0
    %108 = vmatprep.subr.mxu0 0.0
    %109 = vmatpush1.xpose.msra.mxu0 0.0
    %110 = vmatprep.subr.mxu0 0.0
    %111 = vmatpush1.xpose.msra.mxu0 0.0
    %112 = vmatprep.subr.mxu0 0.0
    %113 = vmatpush1.xpose.msra.mxu0 0.0
    %114 = vmatprep.subr.mxu0 0.0
    %115 = vmatpush1.xpose.msra.mxu0 0.0
    %116 = vmatprep.subr.mxu0 0.0
    %117 = vmatpush1.xpose.msra.mxu0 0.0
    %118 = vmatprep.subr.mxu0 0.0
    %119 = vmatpush1.xpose.msra.mxu0 0.0
    %120 = vmatprep.subr.mxu0 0.0
    %121 = vmatpush1.xpose.msra.mxu0 0.0
    %122 = vmatprep.subr.mxu0 0.0
    %123 = vmatpush1.xpose.msra.mxu0 0.0
    %124 = vmatprep.subr.mxu0 0.0
    %125 = vmatpush1.xpose.msra.mxu0 0.0
    %126 = vmatprep.subr.mxu0 0.0
    %127 = vmatpush1.xpose.msra.mxu0 0.0
    %128 = vmatprep.subr.mxu0 0.0
    %129 = vmatpush1.xpose.msra.mxu0 0.0
    %130 = vmatprep.subr.mxu0 0.0
    %131 = vmatpush1.xpose.msra.mxu0 0.0
    %132 = vmatprep.subr.mxu0 0.0
    %133 = vmatpush1.xpose.msra.mxu0 0.0
    %134 = vmatprep.subr.mxu0 0.0
    %135 = vmatpush1.xpose.msra.mxu0 0.0
    %136 = vmatprep.mubr.f32.mxu0 0.0
    %137 = vmatmul.mubr.f32.gmra.mrb[0].mxu0 %v58
    %v138 = vpop.f32.mrb[0].mxu0
    %v139 = vadd.f32 %v39, %v138
    %v140 = vpop.f32.mrb[0].mxu0
    %141 = vmatprep.mubr.f32.mxu0 0.0
    %142 = vmatmul.mubr.f32.gmra.mrb[0].mxu0 %v61
    %v143 = vpop.f32.mrb[0].mxu0
    %v144 = vadd.f32 %v44, %v143
    %v145 = vpop.f32.mrb[0].mxu0
    %146 = vmatprep.mubr.f32.mxu0 0.0
    %147 = vmatmul.mubr.f32.gmra.mrb[0].mxu0 %v64
    %v148 = vpop.f32.mrb[0].mxu0
    %v149 = vadd.f32 %v49, %v148
    %v150 = vpop.f32.mrb[0].mxu0
    %151 = vmatprep.mubr.f32.mxu0 0.0
    %152 = vmatmul.mubr.f32.gmra.mrb[0].mxu0 %v67
    %v153 = vpop.f32.mrb[0].mxu0
    %v154 = vadd.f32 %v54, %v153
    %v155 = vpop.f32.mrb[0].mxu0
    %156 = vdwg.mxu0
    %v157 = vmax.f32 %v139, 0.0
    %v158 = vmax.f32 %v144, 0.0
    %v159 = vmax.f32 %v149, 0.0
    %v160 = vmax.f32 %v154, 0.0
    %v161 = vld [vmem:[%s2] sm:$0xff]
    %v162 = vld [vmem:[%s2 + $0x8] sm:$0xff]
    %v163 = vld [vmem:[%s2 + $0x10] sm:$0xff]
    %v164 = vld [vmem:[%s2 + $0x18] sm:$0xff]
    %v165 = vld [vmem:[%s5] sm:$0xff]
    %v166 = vld [vmem:[%s5 + $0x8] sm:$0xff]
    %v167 = vld [vmem:[%s5 + $0x10] sm:$0xff]
    %v168 = vld [vmem:[%s5 + $0x18] sm:$0xff]
    %170 = vset.pattern.permute.xlu0 0
    %171 = vperm.xlu0 %170, %v165
    %v172 = vpop.permute.xlu0 %171
    %175 = vset.pattern.permute.xlu0 0
    %176 = vperm.xlu0 %175, %v166
    %v177 = vpop.permute.xlu0 %176
    %180 = vset.pattern.permute.xlu0 0
    %181 = vperm.xlu0 %180, %v167
    %v182 = vpop.permute.xlu0 %181
    %185 = vset.pattern.permute.xlu0 0
    %186 = vperm.xlu0 %185, %v168
    %v187 = vpop.permute.xlu0 %186
    %vm189 = vcmask 261120
    %v191 = vsel %vm189, %v161, 0
    %v194 = vsel %vm189, %v162, 0
    %v197 = vsel %vm189, %v163, 0
    %v200 = vsel %vm189, %v164, 0
    %202 = vmatprep.subr.mxu0 0.0
    %203 = vmatpush1.msra.mxu0 %v157
    %204 = vmatprep.subr.mxu0 0.0
    %205 = vmatpush1.msra.mxu0 %v158
    %206 = vmatprep.subr.mxu0 0.0
    %207 = vmatpush1.msra.mxu0 %v159
    %208 = vmatprep.subr.mxu0 0.0
    %209 = vmatpush1.msra.mxu0 %v160
    %210 = vmatprep.subr.mxu0 0.0
    %211 = vmatpush1.msra.mxu0 0.0
    %212 = vmatprep.subr.mxu0 0.0
    %213 = vmatpush1.msra.mxu0 0.0
    %214 = vmatprep.subr.mxu0 0.0
    %215 = vmatpush1.msra.mxu0 0.0
    %216 = vmatprep.subr.mxu0 0.0
    %217 = vmatpush1.msra.mxu0 0.0
    %218 = vmatprep.subr.mxu0 0.0
    %219 = vmatpush1.msra.mxu0 0.0
    %220 = vmatprep.subr.mxu0 0.0
    %221 = vmatpush1.msra.mxu0 0.0
    %222 = vmatprep.subr.mxu0 0.0
    %223 = vmatpush1.msra.mxu0 0.0
    %224 = vmatprep.subr.mxu0 0.0
    %225 = vmatpush1.msra.mxu0 0.0
    %226 = vmatprep.subr.mxu0 0.0
    %227 = vmatpush1.msra.mxu0 0.0
    %228 = vmatprep.subr.mxu0 0.0
    %229 = vmatpush1.msra.mxu0 0.0
    %230 = vmatprep.subr.mxu0 0.0
    %231 = vmatpush1.msra.mxu0 0.0
    %232 = vmatprep.subr.mxu0 0.0
    %233 = vmatpush1.msra.mxu0 0.0
    %234 = vmatprep.subr.mxu0 0.0
    %235 = vmatpush1.msra.mxu0 0.0
    %236 = vmatprep.subr.mxu0 0.0
    %237 = vmatpush1.msra.mxu0 0.0
    %238 = vmatprep.subr.mxu0 0.0
    %239 = vmatpush1.msra.mxu0 0.0
    %240 = vmatprep.subr.mxu0 0.0
    %241 = vmatpush1.msra.mxu0 0.0
    %242 = vmatprep.subr.mxu0 0.0
    %243 = vmatpush1.msra.mxu0 0.0
    %244 = vmatprep.subr.mxu0 0.0
    %245 = vmatpush1.msra.mxu0 0.0
    %246 = vmatprep.subr.mxu0 0.0
    %247 = vmatpush1.msra.mxu0 0.0
    %248 = vmatprep.subr.mxu0 0.0
    %249 = vmatpush1.msra.mxu0 0.0
    %250 = vmatprep.subr.mxu0 0.0
    %251 = vmatpush1.msra.mxu0 0.0
    %252 = vmatprep.subr.mxu0 0.0
    %253 = vmatpush1.msra.mxu0 0.0
    %254 = vmatprep.subr.mxu0 0.0
    %255 = vmatpush1.msra.mxu0 0.0
    %256 = vmatprep.subr.mxu0 0.0
    %257 = vmatpush1.msra.mxu0 0.0
    %258 = vmatprep.subr.mxu0 0.0
    %259 = vmatpush1.msra.mxu0 0.0
    %260 = vmatprep.subr.mxu0 0.0
    %261 = vmatpush1.msra.mxu0 0.0
    %262 = vmatprep.subr.mxu0 0.0
    %263 = vmatpush1.msra.mxu0 0.0
    %264 = vmatprep.subr.mxu0 0.0
    %265 = vmatpush1.msra.mxu0 0.0
    %266 = vmatprep.mubr.f32.mxu0 0.0
    %267 = vmatmul.mubr.f32.gmra.mrb[0].mxu0 %v191
    %v268 = vpop.f32.mrb[0].mxu0
    %v269 = vadd.f32 %v172, %v268
    %v270 = vpop.f32.mrb[0].mxu0
    %271 = vmatprep.mubr.f32.mxu0 0.0
    %272 = vmatmul.mubr.f32.gmra.mrb[0].mxu0 %v194
    %v273 = vpop.f32.mrb[0].mxu0
    %v274 = vadd.f32 %v177, %v273
    %v275 = vpop.f32.mrb[0].mxu0
    %276 = vmatprep.mubr.f32.mxu0 0.0
    %277 = vmatmul.mubr.f32.gmra.mrb[0].mxu0 %v197
    %v278 = vpop.f32.mrb[0].mxu0
    %v279 = vadd.f32 %v182, %v278
    %v280 = vpop.f32.mrb[0].mxu0
    %281 = vmatprep.mubr.f32.mxu0 0.0
    %282 = vmatmul.mubr.f32.gmra.mrb[0].mxu0 %v200
    %v283 = vpop.f32.mrb[0].mxu0
    %v284 = vadd.f32 %v187, %v283
    %v285 = vpop.f32.mrb[0].mxu0
    %286 = vdwg.mxu0
    %v287 = vmax.f32 %v269, 0.0
    %v288 = vmax.f32 %v274, 0.0
    %v289 = vmax.f32 %v279, 0.0
    %v290 = vmax.f32 %v284, 0.0
    %v291 = vld [vmem:[%s3] sm:$0x3]
    %v292 = vld [vmem:[%s6] sm:$0x3]
    %294 = vset.pattern.permute.xlu0 0
    %295 = vperm.xlu0 %294, %v292
    %v296 = vpop.permute.xlu0 %295
    %v299 = vsel %vm189, %v291, 0
    %301 = vmatprep.subr.mxu0 0.0
    %302 = vmatpush1.msra.mxu0 %v287
    %303 = vmatprep.subr.mxu0 0.0
    %304 = vmatpush1.msra.mxu0 %v288
    %305 = vmatprep.subr.mxu0 0.0
    %306 = vmatpush1.msra.mxu0 %v289
    %307 = vmatprep.subr.mxu0 0.0
    %308 = vmatpush1.msra.mxu0 %v290
    %309 = vmatprep.subr.mxu0 0.0
    %310 = vmatpush1.msra.mxu0 0.0
    %311 = vmatprep.subr.mxu0 0.0
    %312 = vmatpush1.msra.mxu0 0.0
    %313 = vmatprep.subr.mxu0 0.0
    %314 = vmatpush1.msra.mxu0 0.0
    %315 = vmatprep.subr.mxu0 0.0
    %316 = vmatpush1.msra.mxu0 0.0
    %317 = vmatprep.subr.mxu0 0.0
    %318 = vmatpush1.msra.mxu0 0.0
    %319 = vmatprep.subr.mxu0 0.0
    %320 = vmatpush1.msra.mxu0 0.0
    %321 = vmatprep.subr.mxu0 0.0
    %322 = vmatpush1.msra.mxu0 0.0
    %323 = vmatprep.subr.mxu0 0.0
    %324 = vmatpush1.msra.mxu0 0.0
    %325 = vmatprep.subr.mxu0 0.0
    %326 = vmatpush1.msra.mxu0 0.0
    %327 = vmatprep.subr.mxu0 0.0
    %328 = vmatpush1.msra.mxu0 0.0
    %329 = vmatprep.subr.mxu0 0.0
    %330 = vmatpush1.msra.mxu0 0.0
    %331 = vmatprep.subr.mxu0 0.0
    %332 = vmatpush1.msra.mxu0 0.0
    %333 = vmatprep.subr.mxu0 0.0
    %334 = vmatpush1.msra.mxu0 0.0
    %335 = vmatprep.subr.mxu0 0.0
    %336 = vmatpush1.msra.mxu0 0.0
    %337 = vmatprep.subr.mxu0 0.0
    %338 = vmatpush1.msra.mxu0 0.0
    %339 = vmatprep.subr.mxu0 0.0
    %340 = vmatpush1.msra.mxu0 0.0
    %341 = vmatprep.subr.mxu0 0.0
    %342 = vmatpush1.msra.mxu0 0.0
    %343 = vmatprep.subr.mxu0 0.0
    %344 = vmatpush1.msra.mxu0 0.0
    %345 = vmatprep.subr.mxu0 0.0
    %346 = vmatpush1.msra.mxu0 0.0
    %347 = vmatprep.subr.mxu0 0.0
    %348 = vmatpush1.msra.mxu0 0.0
    %349 = vmatprep.subr.mxu0 0.0
    %350 = vmatpush1.msra.mxu0 0.0
    %351 = vmatprep.subr.mxu0 0.0
    %352 = vmatpush1.msra.mxu0 0.0
    %353 = vmatprep.subr.mxu0 0.0
    %354 = vmatpush1.msra.mxu0 0.0
    %355 = vmatprep.subr.mxu0 0.0
    %356 = vmatpush1.msra.mxu0 0.0
    %357 = vmatprep.subr.mxu0 0.0
    %358 = vmatpush1.msra.mxu0 0.0
    %359 = vmatprep.subr.mxu0 0.0
    %360 = vmatpush1.msra.mxu0 0.0
    %361 = vmatprep.subr.mxu0 0.0
    %362 = vmatpush1.msra.mxu0 0.0
    %363 = vmatprep.subr.mxu0 0.0
    %364 = vmatpush1.msra.mxu0 0.0
    %365 = vmatprep.mubr.f32.mxu0 0.0
    %366 = vmatmul.mubr.f32.gmra.mrb[0].mxu0 %v299
    %v367 = vpop.f32.mrb[0].mxu0
    %v368 = vadd.f32 %v296, %v367
    %v369 = vpop.f32.mrb[0].mxu0
    %370 = vdwg.mxu0
    %v371 = vtanh.pop %v368
    %v372 = vmul.f32 %v371, 2.0
    %vm373 = vcmask 58368
    %374 = vst.msk [vmem:[#allocation2] sm:$0x3] %vm373, %v372
    // Predicated region
    $region30: #{tpu_custom_call.1} parent=1 // pred_check
      _
    $region31: #{tpu_custom_call.1} parent=1 // pred_check_branch
      %376 = sbr.rel (0) target = $region33
    $region32: #{tpu_custom_call.1} parent=1 // pred_region
      %s378 = ssub.s32 32, 32
      %379 = vsyncadd [#allocation3], %s378
      %s381 = sshll.u32 [#allocation2], 4
      %s382 = int_to_ptr.vmem [resolvable:$true] %s381
      %384 = dma.vmem_to_hbm [thread:$0]  %s382, 32, %s7, [#allocation3]
    $region33: #{tpu_custom_call.1} parent=1 // pred_fallthru
      _
    // Predicated region
    $region34: #{tpu_custom_call.1} parent=1 // pred_check
      _
    $region35: #{tpu_custom_call.1} parent=1 // pred_check_branch
      %386 = sbr.rel (0) target = $region37
    $region36: #{tpu_custom_call.1} parent=1 // pred_region
      %387 = dma.done [#allocation3], 32
    $region37: #{tpu_custom_call.1} parent=1 // pred_fallthru
      _
    %388 = vsyncpa [#allocation3], 1

</llo_original>
